<compile_context>
chip_gen: v5e
topology: v5e:2x2
jax: 0.10.0
libtpu: 0.0.40
codegen_flags: <defaults>
</compile_context>

<pallas_src>
import functools

import jax
import jax.numpy as jnp
from jax.experimental import pallas as pl
from jax.experimental.pallas import tpu as pltpu

_NEG = -1e30  # padding value for the extra vocab columns (exp() underflows to 0)


def _round_up(x, m):
    return (x + m - 1) // m * m


def _bigram_loss_kernel(idx_ref, tgt_ref, emb_ref, logits_ref, loss_ref, *,
                        bt_real):
    # idx_ref    : (tile, 1)       int32   token ids (padded rows hold 0)
    # tgt_ref    : (tile, 1)       int32   target ids (padded rows hold 0)
    # emb_ref    : (V_PAD, V_PAD)  float32 padded table, resident across grid
    # logits_ref : (tile, V_PAD)   float32 lane-dense logits tile
    # loss_ref   : (1, 1)          float32 resident accumulator -> mean CE
    i = pl.program_id(0)
    n = pl.num_programs(0)
    tile = idx_ref.shape[0]
    v_pad = emb_ref.shape[0]

    @pl.when(i == 0)
    def _():
        loss_ref[...] = jnp.zeros_like(loss_ref)

    idx = idx_ref[...]                                              # (tile, 1)
    vocab_iota = jax.lax.broadcasted_iota(jnp.int32, (tile, v_pad), 1)

    # Embedding lookup as a one-hot matmul (MXU-friendly gather).
    one_hot = (vocab_iota == idx).astype(jnp.float32)               # (tile, Vp)
    logits = jnp.dot(one_hot, emb_ref[...],
                     preferred_element_type=jnp.float32)            # (tile, Vp)
    logits_ref[...] = logits

    # Cross-entropy: logsumexp(logits) - logits[target].  Padded columns are
    # -1e30 so they never win the max and contribute exp() = 0.
    tgt = tgt_ref[...]                                              # (tile, 1)
    logit_at_tgt = jnp.sum(jnp.where(vocab_iota == tgt, logits, 0.0),
                           axis=-1, keepdims=True)                  # (tile, 1)
    m = jnp.max(logits, axis=-1, keepdims=True)
    lse = m + jnp.log(jnp.sum(jnp.exp(logits - m), axis=-1, keepdims=True))
    per_token = lse - logit_at_tgt                                  # (tile, 1)

    # Mask rows beyond the real B*T (padding rows contribute 0).
    row = jax.lax.broadcasted_iota(jnp.int32, (tile, 1), 0) + i * tile
    per_token = jnp.where(row < bt_real, per_token, 0.0)

    loss_ref[...] += jnp.sum(per_token, axis=0, keepdims=True)

    @pl.when(i == n - 1)
    def _():
        loss_ref[...] = loss_ref[...] / bt_real


def _bigram_logits_kernel(idx_ref, emb_ref, logits_ref):
    # Inference path: embedding gather only, no cross-entropy work.
    tile = idx_ref.shape[0]
    v_pad = emb_ref.shape[0]
    idx = idx_ref[...]
    vocab_iota = jax.lax.broadcasted_iota(jnp.int32, (tile, v_pad), 1)
    one_hot = (vocab_iota == idx).astype(jnp.float32)
    logits_ref[...] = jnp.dot(one_hot, emb_ref[...],
                              preferred_element_type=jnp.float32)


@functools.partial(jax.jit, static_argnames=("bt_real", "tile"))
def _bigram_loss_call(idx_pad, tgt_pad, emb_pad, *, bt_real, tile):
    bt_pad = idx_pad.shape[0]
    v_pad = emb_pad.shape[0]
    n_tiles = bt_pad // tile
    kernel = functools.partial(_bigram_loss_kernel, bt_real=bt_real)
    logits, loss = pl.pallas_call(
        kernel,
        out_shape=(
            jax.ShapeDtypeStruct((bt_pad, v_pad), jnp.float32),
            jax.ShapeDtypeStruct((1, 1), jnp.float32),
        ),
        grid=(n_tiles,),
        in_specs=[
            pl.BlockSpec((tile, 1), lambda i: (i, 0)),
            pl.BlockSpec((tile, 1), lambda i: (i, 0)),
            pl.BlockSpec((v_pad, v_pad), lambda i: (0, 0)),  # table stays resident
        ],
        out_specs=(
            pl.BlockSpec((tile, v_pad), lambda i: (i, 0)),
            pl.BlockSpec((1, 1), lambda i: (0, 0)),          # resident accumulator
        ),
        compiler_params=pltpu.CompilerParams(
            dimension_semantics=("arbitrary",)),              # cross-tile loss accum
    )(idx_pad, tgt_pad, emb_pad)
    return logits, loss


@functools.partial(jax.jit, static_argnames=("tile",))
def _bigram_logits_call(idx_pad, emb_pad, *, tile):
    bt_pad = idx_pad.shape[0]
    v_pad = emb_pad.shape[0]
    n_tiles = bt_pad // tile
    return pl.pallas_call(
        _bigram_logits_kernel,
        out_shape=jax.ShapeDtypeStruct((bt_pad, v_pad), jnp.float32),
        grid=(n_tiles,),
        in_specs=[
            pl.BlockSpec((tile, 1), lambda i: (i, 0)),
            pl.BlockSpec((v_pad, v_pad), lambda i: (0, 0)),
        ],
        out_specs=pl.BlockSpec((tile, v_pad), lambda i: (i, 0)),
        compiler_params=pltpu.CompilerParams(
            dimension_semantics=("parallel",)),               # independent tiles
    )(idx_pad, emb_pad)


def bigram_forward(emb, idx, targets=None, *, tile_bt=256):
    """Mirrors BigramLanguageModel.forward.

    Returns (logits, loss):
      * targets is None     -> logits shape (B, T, V), loss None
      * targets provided    -> logits shape (B*T, V), loss scalar (matches
                               the PyTorch module, which views logits flat).
    """
    B, T = idx.shape
    V = emb.shape[0]
    BT = B * T
    v_pad = _round_up(V, 128)

    tile = _round_up(min(tile_bt, BT), 8)
    bt_pad = _round_up(BT, tile)

    # Lane-dense padded table: real block in the top-left corner, padded
    # columns filled with a large negative so they vanish from logsumexp.
    # Padded rows are never selected (idx < V), so their contents don't matter.
    emb_pad = jnp.full((v_pad, v_pad), _NEG, jnp.float32)
    emb_pad = emb_pad.at[:V, :V].set(emb.astype(jnp.float32))

    idx_flat = jnp.pad(idx.reshape(BT).astype(jnp.int32),
                       (0, bt_pad - BT)).reshape(bt_pad, 1)

    if targets is None:
        logits_pad = _bigram_logits_call(idx_flat, emb_pad, tile=tile)
        return logits_pad[:BT, :V].reshape(B, T, V), None

    tgt_flat = jnp.pad(targets.reshape(BT).astype(jnp.int32),
                       (0, bt_pad - BT)).reshape(bt_pad, 1)
    logits_pad, loss = _bigram_loss_call(idx_flat, tgt_flat, emb_pad,
                                         bt_real=BT, tile=tile)
    return logits_pad[:BT, :V], loss[0, 0]


if __name__ == "__main__":
    vocab_size = 65   # nanogpt shakespeare char vocab
    B, T = 2, 8

    key = jax.random.PRNGKey(0)
    k_emb, k_idx, k_tgt = jax.random.split(key, 3)

    # nn.Embedding default init: N(0, 1)
    emb_table = jax.random.normal(k_emb, (vocab_size, vocab_size),
                                  dtype=jnp.float32)
    idx = jax.random.randint(k_idx, (B, T), 0, vocab_size, dtype=jnp.int32)
    targets = jax.random.randint(k_tgt, (B, T), 0, vocab_size, dtype=jnp.int32)

    # Training path. tile_bt=8 so this toy size actually exercises a 2-step
    # grid with cross-tile loss accumulation (default tile_bt=256 for real
    # training sizes).
    logits, loss = bigram_forward(emb_table, idx, targets, tile_bt=8)
    jax.block_until_ready((logits, loss))

    # Inference path: logits-only kernel, cross-entropy skipped entirely.
    logits_nt, loss_nt = bigram_forward(emb_table, idx, None, tile_bt=8)
    jax.block_until_ready(logits_nt)
    assert loss_nt is None
    assert logits_nt.shape == (B, T, vocab_size)

    # Reference check in plain JAX.
    ref_logits = emb_table[idx]                               # (B, T, V)
    ref_flat = ref_logits.reshape(B * T, vocab_size)
    ref_lse = jax.scipy.special.logsumexp(ref_flat, axis=-1)
    ref_loss = jnp.mean(ref_lse - ref_flat[jnp.arange(B * T),
                                           targets.reshape(-1)])
    assert logits.shape == (B * T, vocab_size)
    assert jnp.allclose(logits, ref_flat, atol=1e-5)
    assert jnp.allclose(logits_nt, ref_logits, atol=1e-5)
    assert jnp.allclose(loss, ref_loss, atol=1e-5)

    print("KERNEL_OK")
</pallas_src>

<mosaic_0001>
module attributes {stable_mosaic.version = 11 : i64} {
  func.func @_bigram_loss_kernel(%arg0: i32, %arg1: memref<8x1xi32, #tpu.memory_space<vmem>>, %arg2: memref<8x1xi32, #tpu.memory_space<vmem>>, %arg3: memref<128x128xf32, #tpu.memory_space<vmem>>, %arg4: memref<8x128xf32, #tpu.memory_space<vmem>>, %arg5: memref<1x1xf32, #tpu.memory_space<vmem>>) attributes {dimension_semantics = [#tpu.dimension_semantics<arbitrary>], iteration_bounds = array<i64: 2>, scalar_prefetch = 0 : i64, scratch_operands = 0 : i64, tpu.core_type = #tpu.core_type<tc>, window_params = [{transform_indices = @transform_0, window_bounds = array<i64: 8, 1>}, {transform_indices = @transform_1, window_bounds = array<i64: 8, 1>}, {pipeline_mode = #tpu.pipeline_mode<synchronous>, transform_indices = @transform_2, window_bounds = array<i64: 128, 128>}, {transform_indices = @transform_3, window_bounds = array<i64: 8, 128>}, {pipeline_mode = #tpu.pipeline_mode<synchronous>, transform_indices = @transform_4, window_bounds = array<i64: 1, 1>}]} {
    %c0_i32 = arith.constant 0 : i32
    %0 = arith.cmpi eq, %arg0, %c0_i32 : i32
    %1 = arith.extui %0 : i1 to i32
    %c0_i32_0 = arith.constant 0 : i32
    %2 = arith.cmpi ne, %1, %c0_i32_0 : i32
    scf.if %2 {
      %cst_19 = arith.constant 0.000000e+00 : f32
      %45 = vector.broadcast %cst_19 : f32 to vector<1x1xf32>
      %c0_20 = arith.constant 0 : index
      %c0_21 = arith.constant 0 : index
      %46 = vector.load %arg5[%c0_20, %c0_21] : memref<1x1xf32, #tpu.memory_space<vmem>>, vector<1x1xf32>
      tpu.vector_store %arg5[%c0_20, %c0_21], %45 {strides = array<i32>} : memref<1x1xf32, #tpu.memory_space<vmem>>, vector<1x1xf32>,
    } else {
    }
    %c0 = arith.constant 0 : index
    %c0_1 = arith.constant 0 : index
    %3 = vector.load %arg1[%c0, %c0_1] : memref<8x1xi32, #tpu.memory_space<vmem>>, vector<8x1xi32>
    %4 = tpu.iota {dimensions = array<i32: 1>} : vector<8x128xi32>
    %5 = vector.broadcast %3 : vector<8x1xi32> to vector<8x128xi32>
    %6 = arith.cmpi eq, %4, %5 : vector<8x128xi32>
    %7 = arith.extui %6 : vector<8x128xi1> to vector<8x128xi32>
    %8 = arith.sitofp %7 : vector<8x128xi32> to vector<8x128xf32>
    %c0_2 = arith.constant 0 : index
    %c0_3 = arith.constant 0 : index
    %9 = vector.load %arg3[%c0_2, %c0_3] : memref<128x128xf32, #tpu.memory_space<vmem>>, vector<128x128xf32>
    %cst = arith.constant dense<0.000000e+00> : vector<8x128xf32>
    %10 = tpu.matmul %8, %9, %cst {dimension_numbers = #tpu.dot_dimension_numbers<[1], [0], [0], [1], [0, 0, 1, 1], [], []>} : vector<8x128xf32>, vector<128x128xf32>, vector<8x128xf32> -> vector<8x128xf32>
    %c0_4 = arith.constant 0 : index
    %c0_5 = arith.constant 0 : index
    %11 = vector.load %arg4[%c0_4, %c0_5] : memref<8x128xf32, #tpu.memory_space<vmem>>, vector<8x128xf32>
    tpu.vector_store %arg4[%c0_4, %c0_5], %10 {strides = array<i32>} : memref<8x128xf32, #tpu.memory_space<vmem>>, vector<8x128xf32>,
    %c0_6 = arith.constant 0 : index
    %c0_7 = arith.constant 0 : index
    %12 = vector.load %arg2[%c0_6, %c0_7] : memref<8x1xi32, #tpu.memory_space<vmem>>, vector<8x1xi32>
    %13 = vector.broadcast %12 : vector<8x1xi32> to vector<8x128xi32>
    %14 = arith.cmpi eq, %4, %13 : vector<8x128xi32>
    %cst_8 = arith.constant 0.000000e+00 : f32
    %15 = vector.broadcast %cst_8 : f32 to vector<8x128xf32>
    %16 = arith.select %14, %10, %15 : vector<8x128xi1>, vector<8x128xf32>
    %cst_9 = arith.constant dense<0.000000e+00> : vector<8xf32>
    %17 = vector.multi_reduction <add>, %16, %cst_9 [1] : vector<8x128xf32> to vector<8xf32>
    %18 = vector.shape_cast %17 : vector<8xf32> to vector<8x1xf32>
    %cst_10 = arith.constant dense<0xFF800000> : vector<8xf32>
    %19 = vector.multi_reduction <maximumf>, %10, %cst_10 [1] : vector<8x128xf32> to vector<8xf32>
    %20 = vector.shape_cast %19 : vector<8xf32> to vector<8x1xf32>
    %21 = vector.broadcast %20 : vector<8x1xf32> to vector<8x128xf32>
    %22 = arith.subf %10, %21 : vector<8x128xf32>
    %23 = math.exp %22 : vector<8x128xf32>
    %cst_11 = arith.constant dense<0.000000e+00> : vector<8xf32>
    %24 = vector.multi_reduction <add>, %23, %cst_11 [1] : vector<8x128xf32> to vector<8xf32>
    %25 = vector.shape_cast %24 : vector<8xf32> to vector<8x1xf32>
    %26 = math.log %25 : vector<8x1xf32>
    %27 = arith.addf %20, %26 : vector<8x1xf32>
    %28 = arith.subf %27, %18 : vector<8x1xf32>
    %29 = tpu.iota {dimensions = array<i32: 0>} : vector<8x1xi32>
    %c8_i32 = arith.constant 8 : i32
    %30 = arith.muli %arg0, %c8_i32 : i32
    %31 = vector.broadcast %30 : i32 to vector<8x1xi32>
    %32 = arith.addi %29, %31 : vector<8x1xi32>
    %c16_i32 = arith.constant 16 : i32
    %33 = vector.broadcast %c16_i32 : i32 to vector<8x1xi32>
    %34 = arith.cmpi slt, %32, %33 : vector<8x1xi32>
    %cst_12 = arith.constant 0.000000e+00 : f32
    %35 = vector.broadcast %cst_12 : f32 to vector<8x1xf32>
    %36 = arith.select %34, %28, %35 : vector<8x1xi1>, vector<8x1xf32>
    %c0_13 = arith.constant 0 : index
    %c0_14 = arith.constant 0 : index
    %37 = vector.load %arg5[%c0_13, %c0_14] : memref<1x1xf32, #tpu.memory_space<vmem>>, vector<1x1xf32>
    %cst_15 = arith.constant dense<0.000000e+00> : vector<1xf32>
    %38 = vector.multi_reduction <add>, %36, %cst_15 [0] : vector<8x1xf32> to vector<1xf32>
    %39 = vector.shape_cast %38 : vector<1xf32> to vector<1x1xf32>
    %40 = arith.addf %37, %39 : vector<1x1xf32>
    %c0_16 = arith.constant 0 : index
    %c0_17 = arith.constant 0 : index
    %41 = vector.load %arg5[%c0_16, %c0_17] : memref<1x1xf32, #tpu.memory_space<vmem>>, vector<1x1xf32>
    tpu.vector_store %arg5[%c0_16, %c0_17], %40 {strides = array<i32>} : memref<1x1xf32, #tpu.memory_space<vmem>>, vector<1x1xf32>,
    %c1_i32 = arith.constant 1 : i32
    %42 = arith.cmpi eq, %arg0, %c1_i32 : i32
    %43 = arith.extui %42 : i1 to i32
    %c0_i32_18 = arith.constant 0 : i32
    %44 = arith.cmpi ne, %43, %c0_i32_18 : i32
    scf.if %44 {
      %c0_19 = arith.constant 0 : index
      %c0_20 = arith.constant 0 : index
      %45 = vector.load %arg5[%c0_19, %c0_20] : memref<1x1xf32, #tpu.memory_space<vmem>>, vector<1x1xf32>
      %cst_21 = arith.constant 1.600000e+01 : f32
      %46 = vector.broadcast %cst_21 : f32 to vector<1x1xf32>
      %47 = arith.divf %45, %46 : vector<1x1xf32>
      %c0_22 = arith.constant 0 : index
      %c0_23 = arith.constant 0 : index
      %48 = vector.load %arg5[%c0_22, %c0_23] : memref<1x1xf32, #tpu.memory_space<vmem>>, vector<1x1xf32>
      tpu.vector_store %arg5[%c0_22, %c0_23], %47 {strides = array<i32>} : memref<1x1xf32, #tpu.memory_space<vmem>>, vector<1x1xf32>,
    } else {
    }
    return
  }
  func.func @transform_0(%arg0: i32) -> (i32, i32) {
    %c0_i32 = arith.constant 0 : i32
    %c0_i32_0 = arith.constant 0 : i32
    return %arg0, %c0_i32 : i32, i32
  }
  func.func @transform_1(%arg0: i32) -> (i32, i32) {
    %c0_i32 = arith.constant 0 : i32
    %c0_i32_0 = arith.constant 0 : i32
    return %arg0, %c0_i32 : i32, i32
  }
  func.func @transform_2(%arg0: i32) -> (i32, i32) {
    %c0_i32 = arith.constant 0 : i32
    %c0_i32_0 = arith.constant 0 : i32
    %c0_i32_1 = arith.constant 0 : i32
    return %c0_i32, %c0_i32_0 : i32, i32
  }
  func.func @transform_3(%arg0: i32) -> (i32, i32) {
    %c0_i32 = arith.constant 0 : i32
    %c0_i32_0 = arith.constant 0 : i32
    return %arg0, %c0_i32 : i32, i32
  }
  func.func @transform_4(%arg0: i32) -> (i32, i32) {
    %c0_i32 = arith.constant 0 : i32
    %c0_i32_0 = arith.constant 0 : i32
    %c0_i32_1 = arith.constant 0 : i32
    return %c0_i32, %c0_i32_0 : i32, i32
  }
}

</mosaic_0001>

<llo_original>
// kernel: _bigram_loss_call.1
$region0: #{_bigram_loss_call.1}
  #allocation0 [shape = 'u32[]', space=smem, size = 0x4, offset = 0x4, fixed_abs, tag = 'smem constant byte address 0x4 - core index']
  #allocation1 [shape = 'u32[72,128]{1,0:T(1,128)}', space=vmem, size = 0x9000, scoped, tag = 'internal scratch']
  %s0 = inlined_call_operand.vmem [shape: s32[16,1], index: 0, kind: input, shape index: {}]
  %s1 = inlined_call_operand.vmem [shape: s32[16,1], index: 1, kind: input, shape index: {}]
  %s2 = inlined_call_operand.hbm [shape: f32[128,128], index: 2, kind: input, shape index: {}]
  %s3 = inlined_call_operand.hbm [shape: f32[16,128], index: 3, kind: output, shape index: {0}]
  %s4 = inlined_call_operand.hbm [shape: f32[1,1], index: 4, kind: output, shape index: {1}]
  %5 = xla_tuple %s3, %s4
  %s6 = sld [smem:[#allocation0]]
  $region65: #{_bigram_loss_call.1} parent=0
    _
  %s8 = ssub.s32 1, %s6
  %s9 = scalar_select 0, %s8, %s6
  $region1: #{_bigram_loss_call.1} parent=0
    #allocation2 [shape = 'u8[65536]{0}', space=vmem, size = 0x10000, scoped, tag = 'input window, operand 2, single buffered']
    #allocation3 [shape = 's32[2]{0}', space=sflag, size = 0x8, scoped, tag = 'scoped memory for _bigram_loss_call.1']
    #allocation4 [shape = 's32[2]{0}', space=sflag, size = 0x8, scoped, tag = 'scoped memory for _bigram_loss_call.1']
    #allocation5 [shape = 'u8[8192]{0}', space=vmem, size = 0x2000, scoped, tag = 'output window, operand 0']
    #allocation6 [shape = 'u8[512]{0}', space=vmem, size = 0x400, scoped, tag = 'output window, operand 1, single buffered']
    #allocation7 [shape = 's32[1]{0}', space=sflag, size = 0x4, scoped, tag = 'scoped memory for _bigram_loss_call.1']
    %10 = vsyncpa [#allocation3], 0
    %11 = vsyncpa [#allocation4], 0
    %s12 = scalar_lea.sflag [#allocation4], 1
    %13 = vsyncpa %s12, 0
    %14 = vsyncpa [#allocation7], 0
    loop: start=0, step=1, limit=4
    $region2: #{_bigram_loss_call.1} parent=1 // loop_pre_header
      _
    $region3: #{_bigram_loss_call.1} parent=1 // loop_header
      %s16 = sphi 0, %s20
      %p17 = scmp.ge.s32.totalorder %s16, 4
      %s26 = sphi 0, %s28
      %s29 = sphi 0, %s26
      %s30 = sphi 0, %s29
      %s46 = sphi 0, %s30
      %s52 = sphi 0, %s54
      %s55 = sphi 0, %s52
      %s56 = sphi 0, %s55
      %s72 = sphi 0, %s56
      %s76 = sphi 0, %s76
      %s78 = sphi 0, %s76
      %s79 = sphi 0, %s78
      %s93 = sphi 0, %s79
      %s99 = sphi 0, %s101
      %s102 = sphi 0, %s99
      %s103 = sphi 0, %s102
      %s119 = sphi 0, %s103
      %s123 = sphi 0, %s123
      %s125 = sphi 0, %s123
      %s126 = sphi 0, %s125
      %s140 = sphi 0, %s126
    $region4: #{_bigram_loss_call.1} parent=1 // loop_header_branch
      %19 = sbr.rel (%p17) target = $region8
    $region5: #{_bigram_loss_call.1} parent=1 // loop_body
      %s21 = ssub.s32 %s16, 1
      %s22 = ssub.s32 %s16, 2
      %s23 = sadd.s32 %s16, 1
      %s24 = ssub.s32 %s16, %s23
      %p25 = scmp.eq.s32.totalorder %s24, 0
      %s27 = sadd.s32 %s26, 1
      %s28 = scalar_select %p25, %s26, %s27
      %p31 = pneg %p25
      %p32 = scmp.eq.s32.totalorder %s16, 1
      %p33 = por %p31, %p32
      %p34 = scmp.ne.s32.totalorder %s26, %s29
      %p35 = scmp.eq.s32.totalorder %s16, 0
      %p36 = por %p34, %p35
      %p37 = scmp.ne.s32.totalorder %s26, %s29
      %p38 = scmp.eq.s32.totalorder %s21, 1
      %p39 = por %p37, %p38
      %p40 = scmp.ne.s32.totalorder %s29, %s30
      %p41 = scmp.eq.s32.totalorder %s21, 0
      %p42 = por %p40, %p41
      %p43 = scmp.ne.s32.totalorder %s29, %s30
      %p44 = scmp.eq.s32.totalorder %s22, 1
      %p45 = por %p43, %p44
      %p47 = scmp.ne.s32.totalorder %s30, %s46
      %p48 = scmp.eq.s32.totalorder %s22, 0
      %p49 = por %p47, %p48
      %s50 = ssub.s32 %s16, %s23
      %p51 = scmp.eq.s32.totalorder %s50, 0
      %s53 = sadd.s32 %s52, 1
      %s54 = scalar_select %p51, %s52, %s53
      %p57 = pneg %p51
      %p58 = scmp.eq.s32.totalorder %s16, 1
      %p59 = por %p57, %p58
      %p60 = scmp.ne.s32.totalorder %s52, %s55
      %p61 = scmp.eq.s32.totalorder %s16, 0
      %p62 = por %p60, %p61
      %p63 = scmp.ne.s32.totalorder %s52, %s55
      %p64 = scmp.eq.s32.totalorder %s21, 1
      %p65 = por %p63, %p64
      %p66 = scmp.ne.s32.totalorder %s55, %s56
      %p67 = scmp.eq.s32.totalorder %s21, 0
      %p68 = por %p66, %p67
      %p69 = scmp.ne.s32.totalorder %s55, %s56
      %p70 = scmp.eq.s32.totalorder %s22, 1
      %p71 = por %p69, %p70
      %p73 = scmp.ne.s32.totalorder %s56, %s72
      %p74 = scmp.eq.s32.totalorder %s22, 0
      %p75 = por %p73, %p74
      %s77 = sadd.s32 %s76, 1
      %p80 = scmp.eq.s32.totalorder %s16, 1
      %p81 = scmp.ne.s32.totalorder %s76, %s78
      %p82 = scmp.eq.s32.totalorder %s16, 0
      %p83 = por %p81, %p82
      %p84 = scmp.ne.s32.totalorder %s76, %s78
      %p85 = scmp.eq.s32.totalorder %s21, 1
      %p86 = por %p84, %p85
      %p87 = scmp.ne.s32.totalorder %s78, %s79
      %p88 = scmp.eq.s32.totalorder %s21, 0
      %p89 = por %p87, %p88
      %p90 = scmp.ne.s32.totalorder %s78, %s79
      %p91 = scmp.eq.s32.totalorder %s22, 1
      %p92 = por %p90, %p91
      %p94 = scmp.ne.s32.totalorder %s79, %s93
      %p95 = scmp.eq.s32.totalorder %s22, 0
      %p96 = por %p94, %p95
      %s97 = ssub.s32 %s16, %s23
      %p98 = scmp.eq.s32.totalorder %s97, 0
      %s100 = sadd.s32 %s99, 1
      %s101 = scalar_select %p98, %s99, %s100
      %p104 = pneg %p98
      %p105 = scmp.eq.s32.totalorder %s16, 1
      %p106 = por %p104, %p105
      %p107 = scmp.ne.s32.totalorder %s99, %s102
      %p108 = scmp.eq.s32.totalorder %s16, 0
      %p109 = por %p107, %p108
      %p110 = scmp.ne.s32.totalorder %s99, %s102
      %p111 = scmp.eq.s32.totalorder %s21, 1
      %p112 = por %p110, %p111
      %p113 = scmp.ne.s32.totalorder %s102, %s103
      %p114 = scmp.eq.s32.totalorder %s21, 0
      %p115 = por %p113, %p114
      %p116 = scmp.ne.s32.totalorder %s102, %s103
      %p117 = scmp.eq.s32.totalorder %s22, 1
      %p118 = por %p116, %p117
      %p120 = scmp.ne.s32.totalorder %s103, %s119
      %p121 = scmp.eq.s32.totalorder %s22, 0
      %p122 = por %p120, %p121
      %s124 = sadd.s32 %s123, 1
      %p127 = scmp.eq.s32.totalorder %s16, 1
      %p128 = scmp.ne.s32.totalorder %s123, %s125
      %p129 = scmp.eq.s32.totalorder %s16, 0
      %p130 = por %p128, %p129
      %p131 = scmp.ne.s32.totalorder %s123, %s125
      %p132 = scmp.eq.s32.totalorder %s21, 1
      %p133 = por %p131, %p132
      %p134 = scmp.ne.s32.totalorder %s125, %s126
      %p135 = scmp.eq.s32.totalorder %s21, 0
      %p136 = por %p134, %p135
      %p137 = scmp.ne.s32.totalorder %s125, %s126
      %p138 = scmp.eq.s32.totalorder %s22, 1
      %p139 = por %p137, %p138
      %p141 = scmp.ne.s32.totalorder %s126, %s140
      %p142 = scmp.eq.s32.totalorder %s22, 0
      %p143 = por %p141, %p142
      %p144 = scmp.le.s32.totalorder 1, %s16
      %p145 = scmp.lt.s32.totalorder %s16, 3
      %p146 = pnand %p144, %p145
      %p147 = pneg %p146
      // Predicated region
      $region9: #{_bigram_loss_call.1} parent=5 // pred_check
        _
      $region10: #{_bigram_loss_call.1} parent=5 // pred_check_branch
        %149 = sbr.rel (%p146) target = $region12
      $region11: #{_bigram_loss_call.1} parent=5 // pred_region
        %s150 = ssub.s32 %s16, 1
        // Predicated region
        $region13: #{_bigram_loss_call.1} parent=11 // pred_check
          %p151 = pneg %p89
        $region14: #{_bigram_loss_call.1} parent=11 // pred_check_branch
          %153 = sbr.rel (%p151) target = $region16
        $region15: #{_bigram_loss_call.1} parent=11 // pred_region
          %155 = vsyncadd [#allocation3], 0
          %s156 = sshll.u32 %s2, 4
          %s157 = int_to_ptr.hbm [resolvable:$true] %s156
          %s158 = sshll.u32 [#allocation2], 4
          %s159 = int_to_ptr.vmem [resolvable:$true] %s158
          %164 = dma.hbm_to_vmem [thread:$0]  %s157, 2048, %s159, [#allocation3], 128, 128, 8
        $region16: #{_bigram_loss_call.1} parent=11 // pred_fallthru
          _
      $region12: #{_bigram_loss_call.1} parent=5 // pred_fallthru
        _
      %p165 = scmp.lt.s32.totalorder %s16, 2
      // Predicated region
      $region17: #{_bigram_loss_call.1} parent=5 // pred_check
        %p166 = pneg %p165
      $region18: #{_bigram_loss_call.1} parent=5 // pred_check_branch
        %168 = sbr.rel (%p166) target = $region20
      $region19: #{_bigram_loss_call.1} parent=5 // pred_region
        // Predicated region
        $region21: #{_bigram_loss_call.1} parent=19 // pred_check
          %p169 = pneg %p36
        $region22: #{_bigram_loss_call.1} parent=19 // pred_check_branch
          %171 = sbr.rel (%p169) target = $region24
        $region23: #{_bigram_loss_call.1} parent=19 // pred_region
          %p172 = scmp.lt.s32.totalorder %s16, 1
          %s173 = scalar_select %p172, %s16, 1
          %s174 = smul.addr %s173, 8
          %s175 = scalar_lea.vmem %s0, %s174
        $region24: #{_bigram_loss_call.1} parent=19 // pred_fallthru
          _
        // Predicated region
        $region25: #{_bigram_loss_call.1} parent=19 // pred_check
          %p176 = pneg %p62
        $region26: #{_bigram_loss_call.1} parent=19 // pred_check_branch
          %178 = sbr.rel (%p176) target = $region28
        $region27: #{_bigram_loss_call.1} parent=19 // pred_region
          %p179 = scmp.lt.s32.totalorder %s16, 1
          %s180 = scalar_select %p179, %s16, 1
          %s181 = smul.addr %s180, 8
          %s182 = scalar_lea.vmem %s1, %s181
        $region28: #{_bigram_loss_call.1} parent=19 // pred_fallthru
          _
      $region20: #{_bigram_loss_call.1} parent=5 // pred_fallthru
        _
      %p183 = scmp.le.s32.totalorder 1, %s16
      %p184 = scmp.lt.s32.totalorder %s16, 3
      %p185 = pnand %p183, %p184
      %p186 = pneg %p185
      // Predicated region
      $region29: #{_bigram_loss_call.1} parent=5 // pred_check
        _
      $region30: #{_bigram_loss_call.1} parent=5 // pred_check_branch
        %188 = sbr.rel (%p185) target = $region32
      $region31: #{_bigram_loss_call.1} parent=5 // pred_region
        %s189 = ssub.s32 %s16, 1
        // Predicated region
        $region33: #{_bigram_loss_call.1} parent=31 // pred_check
          %p190 = pneg %p89
        $region34: #{_bigram_loss_call.1} parent=31 // pred_check_branch
          %192 = sbr.rel (%p190) target = $region36
        $region35: #{_bigram_loss_call.1} parent=31 // pred_region
          %194 = dma.done [#allocation3], 2048
        $region36: #{_bigram_loss_call.1} parent=31 // pred_fallthru
          _
        %p195 = scmp.lt.s32.totalorder %s21, 1
        %s196 = scalar_select %p195, %s21, 1
        %s197 = smul.addr %s196, 8
        %s198 = scalar_lea.vmem %s0, %s197
        %p199 = pneg %p42
        %p200 = pneg %p39
        %p201 = scmp.lt.s32.totalorder %s21, 1
        %s202 = scalar_select %p201, %s21, 1
        %s203 = smul.addr %s202, 8
        %s204 = scalar_lea.vmem %s1, %s203
        %p205 = pneg %p68
        %p206 = pneg %p65
        %p207 = pneg %p89
        %p208 = pneg %p86
        %p209 = pneg %p115
        %p210 = pneg %p112
        %s211 = sand.u32 %s102, 1
        %s212 = scalar_lea.sflag [#allocation4], %s211
        %s213 = sand.u32 %s102, 1
        %s214 = smul.addr %s213, 8
        %s215 = scalar_lea.vmem [#allocation5], %s214
        %p216 = pneg %p136
        %p217 = pneg %p133
        %p218 = scmp.lt.s32.totalorder %s21, 1
        %s219 = scalar_select %p218, %s21, 1
        %s220 = smul.addr %s219, 8
        %s221 = scalar_lea.vmem %s0, %s220
        %p222 = scmp.lt.s32.totalorder %s21, 1
        %s223 = scalar_select %p222, %s21, 1
        %s224 = smul.addr %s223, 8
        %s225 = scalar_lea.vmem %s1, %s224
        %p226 = scmp.eq.s32.totalorder %s21, 0
        // Predicated region
        $region37: #{_bigram_loss_call.1} parent=31 // pred_check
          %p227 = pneg %p226
        $region38: #{_bigram_loss_call.1} parent=31 // pred_check_branch
          %229 = sbr.rel (%p227) target = $region40
        $region39: #{_bigram_loss_call.1} parent=31 // pred_region
          %vm230 = vcmask 0
          %231 = vst.msk [vmem:[#allocation6] sm:$0x1] %vm230, 0.0
        $region40: #{_bigram_loss_call.1} parent=31 // pred_fallthru
          _
        %v232 = vld [vmem:[%s221] sm:$0xff]
        %v233 = vlaneseq
        %v234 = vand.u32 %v233, 127
        %235 = vset.pattern.permute.xlu0 0
        %236 = vperm.xlu0 %235, %v232
        %v237 = vpop.permute.xlu0 %236
        %vm238 = vcmp.eq.s32.totalorder %v234, %v237
        %v239 = vsel %vm238, 1, 0
        %v240 = vcvt.s32.f32 %v239
        %v241 = vld [vmem:[#allocation2] sm:$0xff]
        %v242 = vld [vmem:[#allocation2 + $0x8] sm:$0xff]
        %v243 = vld [vmem:[#allocation2 + $0x10] sm:$0xff]
        %v244 = vld [vmem:[#allocation2 + $0x18] sm:$0xff]
        %v245 = vld [vmem:[#allocation2 + $0x20] sm:$0xff]
        %v246 = vld [vmem:[#allocation2 + $0x28] sm:$0xff]
        %v247 = vld [vmem:[#allocation2 + $0x30] sm:$0xff]
        %v248 = vld [vmem:[#allocation2 + $0x38] sm:$0xff]
        %v249 = vld [vmem:[#allocation2 + $0x40] sm:$0xff]
        %v250 = vld [vmem:[#allocation2 + $0x48] sm:$0xff]
        %v251 = vld [vmem:[#allocation2 + $0x50] sm:$0xff]
        %v252 = vld [vmem:[#allocation2 + $0x58] sm:$0xff]
        %v253 = vld [vmem:[#allocation2 + $0x60] sm:$0xff]
        %v254 = vld [vmem:[#allocation2 + $0x68] sm:$0xff]
        %v255 = vld [vmem:[#allocation2 + $0x70] sm:$0xff]
        %v256 = vld [vmem:[#allocation2 + $0x78] sm:$0xff]
        %257 = vmatpush.msra.mxu0 %v256
        %258 = vmatpush.msra.mxu0 %v255
        %259 = vmatpush.msra.mxu0 %v254
        %260 = vmatpush.msra.mxu0 %v253
        %261 = vmatpush.msra.mxu0 %v252
        %262 = vmatpush.msra.mxu0 %v251
        %263 = vmatpush.msra.mxu0 %v250
        %264 = vmatpush.msra.mxu0 %v249
        %265 = vmatpush.msra.mxu0 %v248
        %266 = vmatpush.msra.mxu0 %v247
        %267 = vmatpush.msra.mxu0 %v246
        %268 = vmatpush.msra.mxu0 %v245
        %269 = vmatpush.msra.mxu0 %v244
        %270 = vmatpush.msra.mxu0 %v243
        %271 = vmatpush.msra.mxu0 %v242
        %272 = vmatpush.msra.mxu0 %v241
        %273 = vmatmul.f32.gmra.mxu0 %v240
        %v274 = vpop.f32.mrf.mxu0
        %v275 = vadd.f32 0.0, %v274
        %276 = vdwg.mxu0
        %277 = vst [vmem:[%s215] sm:$0xff] %v275
        %v278 = vld [vmem:[%s225] sm:$0xff]
        %279 = vset.pattern.permute.xlu0 0
        %280 = vperm.xlu0 %279, %v278
        %v281 = vpop.permute.xlu0 %280
        %vm282 = vcmp.eq.s32.totalorder %v234, %v281
        %v283 = vsel %vm282, %v275, 0.0
        %284 = vadd.xlane.f32.xlu0 %v283
        %v285 = vpop.xlane.xlu0 %284
        %286 = vmax.xlane.f32.xlu0 %v275
        %v287 = vpop.xlane.xlu0 %286
        %v288 = vsub.f32 %v275, %v287
        %v289 = vmul.f32 %v288, 1.442695
        %v290 = vpow.pop %v289
        %291 = vadd.xlane.f32.xlu0 %v290
        %v292 = vpop.xlane.xlu0 %291
        %v293 = vlog2.pop %v292
        %v294 = vmul.f32 %v293, 0.6931472
        %v295 = vadd.f32 %v287, %v294
        %v296 = vsub.f32 %v295, %v285
        %v297 = vlaneseq
        %v298 = vshrl.u32 %v297, 7
        %s299 = smul.u32 %s21, 8
        %v300 = vstv %s299
        %v301 = vadd.s32 %v298, %v300
        %vm302 = vcmp.lt.s32.totalorder %v301, 16
        %v303 = vsel %vm302, %v296, 0.0
        %v304 = vld [vmem:[#allocation6] sm:$0x1]
        %v305 = vrot.slane %v303, 4
        %v306 = vadd.f32 %v303, %v305
        %v307 = vrot.slane %v306, 2
        %v308 = vadd.f32 %v306, %v307
        %v309 = vrot.slane %v308, 1
        %v310 = vadd.f32 %v308, %v309
        %v311 = vadd.f32 %v304, %v310
        %vm312 = vcmask 0
        %313 = vst.msk [vmem:[#allocation6] sm:$0x1] %vm312, %v311
        %p314 = scmp.eq.s32.totalorder %s21, 1
        // Predicated region
        $region41: #{_bigram_loss_call.1} parent=31 // pred_check
          %p315 = pneg %p314
        $region42: #{_bigram_loss_call.1} parent=31 // pred_check_branch
          %317 = sbr.rel (%p315) target = $region44
        $region43: #{_bigram_loss_call.1} parent=31 // pred_region
          %v318 = vld [vmem:[#allocation6] sm:$0x1]
          %v319 = vrcp.pop 16.0
          %v320 = vmul.f32 16.0, %v319
          %v321 = vsub.f32 1.0, %v320
          %v322 = vmul.f32 %v319, %v321
          %v323 = vadd.f32 %v319, %v322
          %vm324 = vweird.f32 %v319
          %v325 = vsel %vm324, %v319, %v323
          %v326 = vmul.f32 %v318, %v325
          %327 = vst.msk [vmem:[#allocation6] sm:$0x1] %vm312, %v326
        $region44: #{_bigram_loss_call.1} parent=31 // pred_fallthru
          _
        %s328 = sand.u32 %s102, 1
        %s329 = scalar_lea.sflag [#allocation4], %s328
        %s330 = sand.u32 %s102, 1
        %s331 = smul.addr %s330, 8
        %s332 = scalar_lea.vmem [#allocation5], %s331
        // Predicated region
        $region45: #{_bigram_loss_call.1} parent=31 // pred_check
          %p333 = pneg %p112
        $region46: #{_bigram_loss_call.1} parent=31 // pred_check_branch
          %335 = sbr.rel (%p333) target = $region48
        $region47: #{_bigram_loss_call.1} parent=31 // pred_region
          %337 = vsyncadd %s329, 0
          %s338 = smul.addr %s21, 8
          %s339 = scalar_lea.hbm %s3, %s338
          %s341 = sshll.u32 %s332, 4
          %s342 = int_to_ptr.vmem [resolvable:$true] %s341
          %s343 = sshll.u32 %s339, 4
          %s344 = int_to_ptr.hbm [resolvable:$true] %s343
          %346 = dma.vmem_to_hbm [thread:$0]  %s342, 128, %s344, %s329
        $region48: #{_bigram_loss_call.1} parent=31 // pred_fallthru
          _
        // Predicated region
        $region49: #{_bigram_loss_call.1} parent=31 // pred_check
          %p347 = pneg %p133
        $region50: #{_bigram_loss_call.1} parent=31 // pred_check_branch
          %349 = sbr.rel (%p347) target = $region52
        $region51: #{_bigram_loss_call.1} parent=31 // pred_region
          %351 = vsyncadd [#allocation7], 0
          %s353 = sshll.u32 [#allocation6], 4
          %s354 = int_to_ptr.vmem [resolvable:$true] %s353
          %s355 = sshll.u32 %s4, 4
          %s356 = int_to_ptr.hbm [resolvable:$true] %s355
          %358 = dma.vmem_to_hbm [thread:$0]  %s354, 16, %s356, [#allocation7]
        $region52: #{_bigram_loss_call.1} parent=31 // pred_fallthru
          _
        // Predicated region
        $region53: #{_bigram_loss_call.1} parent=31 // pred_check
          %p359 = pneg %p133
        $region54: #{_bigram_loss_call.1} parent=31 // pred_check_branch
          %361 = sbr.rel (%p359) target = $region56
        $region55: #{_bigram_loss_call.1} parent=31 // pred_region
          %363 = dma.done [#allocation7], 16
        $region56: #{_bigram_loss_call.1} parent=31 // pred_fallthru
          _
      $region32: #{_bigram_loss_call.1} parent=5 // pred_fallthru
        _
      %p364 = scmp.le.s32.totalorder 2, %s16
      // Predicated region
      $region57: #{_bigram_loss_call.1} parent=5 // pred_check
        %p365 = pneg %p364
      $region58: #{_bigram_loss_call.1} parent=5 // pred_check_branch
        %367 = sbr.rel (%p365) target = $region60
      $region59: #{_bigram_loss_call.1} parent=5 // pred_region
        %s368 = ssub.s32 %s16, 2
        // Predicated region
        $region61: #{_bigram_loss_call.1} parent=59 // pred_check
          %p369 = pneg %p118
        $region62: #{_bigram_loss_call.1} parent=59 // pred_check_branch
          %371 = sbr.rel (%p369) target = $region64
        $region63: #{_bigram_loss_call.1} parent=59 // pred_region
          %s372 = sand.u32 %s103, 1
          %s373 = scalar_lea.sflag [#allocation4], %s372
          %s374 = sand.u32 %s103, 1
          %s375 = smul.addr %s374, 8
          %s376 = scalar_lea.vmem [#allocation5], %s375
          %378 = dma.done %s373, 128
        $region64: #{_bigram_loss_call.1} parent=59 // pred_fallthru
          _
      $region60: #{_bigram_loss_call.1} parent=5 // pred_fallthru
        _
    $region6: #{_bigram_loss_call.1} parent=1 // loop_footer
      %s20 = sadd.s32 1, %s16
    $region7: #{_bigram_loss_call.1} parent=1 // loop_footer_branch
      %15 = sbr.rel target = $region3
    $region8: #{_bigram_loss_call.1} parent=1 // loop_exit
      _
    %379 = vsyncpa [#allocation3], 1
    %s380 = scalar_lea.sflag [#allocation3], 1
    %381 = vsyncpa %s380, 1
    %382 = vsyncpa [#allocation4], 1
    %s383 = scalar_lea.sflag [#allocation4], 1
    %384 = vsyncpa %s383, 1
    %385 = vsyncpa [#allocation7], 1

</llo_original>
